<compile_context>
chip_gen: v5e
topology: v5e:2x2
jax: 0.10.0
libtpu: 0.0.40
codegen_flags: <defaults>
</compile_context>

<pallas_src>
import numpy as np
import jax
import jax.numpy as jnp
from jax.experimental import pallas as pl
from jax.experimental.pallas import tpu as pltpu


def adjust_layer_forward(x_nchw, conv_w, bn_gamma, bn_beta, bn_mean, bn_var,
                         center_size=7, eps=1e-5, compute_dtype=jnp.bfloat16,
                         thw_tile=512):
    """Pallas implementation of AdjustLayer.forward (eval-mode BN).

    x_nchw : (N, Cin, H, W)
    conv_w : (Cout, Cin, 1, 1)
    compute_dtype : dtype for x / folded weight (default bf16; accumulation is f32).
    thw_tile : pixel-tile width for the uncropped (W >= 20) path; multiple of 128.
    """
    N, Cin, H, W = x_nchw.shape
    Cout = conv_w.shape[0]
    out_dtype = x_nchw.dtype
    HW = H * W

    # ---- fold BN (eval mode) into the 1x1 conv:  y = (w * scale) @ x + shift ----
    scale = bn_gamma / jnp.sqrt(bn_var + eps)                      # (Cout,)
    w_folded = conv_w.reshape(Cout, Cin) * scale[:, None]          # (Cout, Cin)
    shift = (bn_beta - bn_mean * scale).reshape(Cout, 1).astype(jnp.float32)

    # channel-major flatten: metadata-only reshape, no HBM transpose / copy
    x_slab = x_nchw.reshape(N, Cin, HW)

    if compute_dtype is not None:
        x_slab = x_slab.astype(compute_dtype)
        w_folded = w_folded.astype(compute_dtype)
    else:
        w_folded = w_folded.astype(x_slab.dtype)

    if W < 20:
        # ------------------ cropped path: conv+BN+center-crop fused ------------------
        l = (W - center_size) // 2
        r = l + center_size
        Hc = min(r, H) - l          # matches x[:, :, l:r, l:r] semantics
        Wc = r - l

        # Constant 0/1 gather matrix implementing the crop: column k selects
        # flattened pixel (l + k // Wc) * W + (l + k % Wc).  Compile-time constant.
        row_idx = ((l + np.arange(Hc))[:, None] * W +
                   (l + np.arange(Wc))[None, :]).reshape(-1)       # (Hc*Wc,)
        sel_np = np.zeros((HW, Hc * Wc), np.float32)
        sel_np[row_idx, np.arange(Hc * Wc)] = 1.0
        sel = jnp.asarray(sel_np)                                  # (HW, Hc*Wc) f32

        # <=2 big grid steps (amortize per-step cost), >=2 blocks when N>=2 (v7x megacore)
        B = pl.cdiv(N, 2)
        nb = pl.cdiv(N, B)

        def crop_kernel(x_ref, w_ref, shift_ref, sel_ref, o_ref):
            # x_ref: (B, Cin, H*W) uncropped slabs; o_ref: (B, Cout, Hc*Wc)
            w = w_ref[...]
            s = sel_ref[...]
            sh = shift_ref[...]
            for b in range(B):                                  # static unroll
                acc = jnp.dot(w, x_ref[b],
                              preferred_element_type=jnp.float32)     # (Cout, H*W)
                yc = jnp.dot(acc, s,
                             preferred_element_type=jnp.float32) + sh  # (Cout, Hc*Wc)
                o_ref[b] = yc.astype(o_ref.dtype)

        y_slab = pl.pallas_call(
            crop_kernel,
            out_shape=jax.ShapeDtypeStruct((N, Cout, Hc * Wc), out_dtype),
            grid_spec=pltpu.PrefetchScalarGridSpec(
                num_scalar_prefetch=0,
                grid=(nb,),
                in_specs=[
                    pl.BlockSpec((B, Cin, HW), lambda i: (i, 0, 0)),
                    pl.BlockSpec((Cout, Cin), lambda i: (0, 0)),
                    pl.BlockSpec((Cout, 1), lambda i: (0, 0)),
                    pl.BlockSpec((HW, Hc * Wc), lambda i: (0, 0)),
                ],
                out_specs=pl.BlockSpec((B, Cout, Hc * Wc), lambda i: (i, 0, 0)),
            ),
            compiler_params=pltpu.CompilerParams(
                dimension_semantics=("parallel",)),
        )(x_slab, w_folded, shift, sel)
        # channel-major already -> free reshape to NCHW
        return y_slab.reshape(N, Cout, Hc, Wc)

    else:
        # ------------- uncropped path: lane-dense pixel tiling, no crop -------------
        THW = int(thw_tile)
        if THW >= HW:
            THW = HW                              # full-extent last dim is allowed
        else:
            THW = max(128, (THW // 128) * 128)    # lane-dense, VMEM-bounded tiles
        nt = pl.cdiv(HW, THW)

        def tile_kernel(x_ref, w_ref, shift_ref, o_ref):
            # x_ref: (1, Cin, THW); o_ref: (1, Cout, THW)
            acc = jnp.dot(w_ref[...], x_ref[0],
                          preferred_element_type=jnp.float32)
            o_ref[0] = (acc + shift_ref[...]).astype(o_ref.dtype)

        y_slab = pl.pallas_call(
            tile_kernel,
            out_shape=jax.ShapeDtypeStruct((N, Cout, HW), out_dtype),
            grid_spec=pltpu.PrefetchScalarGridSpec(
                num_scalar_prefetch=0,
                grid=(N, nt),
                in_specs=[
                    pl.BlockSpec((1, Cin, THW), lambda n, t: (n, 0, t)),
                    pl.BlockSpec((Cout, Cin), lambda n, t: (0, 0)),
                    pl.BlockSpec((Cout, 1), lambda n, t: (0, 0)),
                ],
                out_specs=pl.BlockSpec((1, Cout, THW), lambda n, t: (n, 0, t)),
            ),
            compiler_params=pltpu.CompilerParams(
                dimension_semantics=("parallel", "parallel")),
        )(x_slab, w_folded, shift)
        return y_slab.reshape(N, Cout, H, W)


def _reference(x_nchw, conv_w, bn_gamma, bn_beta, bn_mean, bn_var,
               center_size=7, eps=1e-5):
    # pure-JAX reference matching the PyTorch module (eval-mode BN, crop after conv)
    y = jnp.einsum('nchw,oc->nohw', x_nchw, conv_w.reshape(conv_w.shape[0], -1))
    scale = bn_gamma / jnp.sqrt(bn_var + eps)
    shift = bn_beta - bn_mean * scale
    y = y * scale[None, :, None, None] + shift[None, :, None, None]
    W = y.shape[3]
    if W < 20:
        l = (W - center_size) // 2
        r = l + center_size
        y = y[:, :, l:r, l:r]
    return y


if __name__ == "__main__":
    key = jax.random.PRNGKey(0)
    k1, k2, k3, k4, k5, k6, k7 = jax.random.split(key, 7)

    N, Cin, Cout = 2, 8, 4

    conv_w = jax.random.normal(k2, (Cout, Cin, 1, 1), dtype=jnp.float32) * 0.1
    bn_gamma = 1.0 + 0.1 * jax.random.normal(k3, (Cout,), dtype=jnp.float32)
    bn_beta = 0.1 * jax.random.normal(k4, (Cout,), dtype=jnp.float32)
    bn_mean = 0.1 * jax.random.normal(k5, (Cout,), dtype=jnp.float32)
    bn_var = jnp.abs(jax.random.normal(k6, (Cout,), dtype=jnp.float32)) + 0.5

    # ---- cropped path (W < 20), strict f32 check ----
    x = jax.random.normal(k1, (N, Cin, 16, 16), dtype=jnp.float32)
    out = adjust_layer_forward(x, conv_w, bn_gamma, bn_beta, bn_mean, bn_var,
                               compute_dtype=jnp.float32)
    out = jax.block_until_ready(out)
    ref = _reference(x, conv_w, bn_gamma, bn_beta, bn_mean, bn_var)
    assert out.shape == (N, Cout, 7, 7), out.shape
    assert jnp.allclose(out, ref, atol=1e-4, rtol=1e-4)

    # ---- cropped path, default bf16 compute (f32 accumulation / f32 output) ----
    out_bf = adjust_layer_forward(x, conv_w, bn_gamma, bn_beta, bn_mean, bn_var)
    out_bf = jax.block_until_ready(out_bf)
    assert out_bf.shape == (N, Cout, 7, 7), out_bf.shape
    assert jnp.allclose(out_bf, ref, atol=3e-2, rtol=3e-2)

    # ---- uncropped / lane-dense tiled path (W >= 20), strict f32 check ----
    x2 = jax.random.normal(k7, (N, Cin, 32, 32), dtype=jnp.float32)
    out2 = adjust_layer_forward(x2, conv_w, bn_gamma, bn_beta, bn_mean, bn_var,
                                compute_dtype=jnp.float32)
    out2 = jax.block_until_ready(out2)
    ref2 = _reference(x2, conv_w, bn_gamma, bn_beta, bn_mean, bn_var)
    assert out2.shape == (N, Cout, 32, 32), out2.shape
    assert jnp.allclose(out2, ref2, atol=1e-4, rtol=1e-4)

    print("KERNEL_OK")
</pallas_src>

<mosaic_0001>
module attributes {stable_mosaic.version = 11 : i64} {
  func.func @crop_kernel(%arg0: i32, %arg1: memref<1x8x256xf32, #tpu.memory_space<vmem>>, %arg2: memref<4x8xf32, #tpu.memory_space<vmem>>, %arg3: memref<4x1xf32, #tpu.memory_space<vmem>>, %arg4: memref<256x49xf32, #tpu.memory_space<vmem>>, %arg5: memref<1x4x49xf32, #tpu.memory_space<vmem>>) attributes {dimension_semantics = [#tpu.dimension_semantics<parallel>], iteration_bounds = array<i64: 2>, scalar_prefetch = 0 : i64, scratch_operands = 0 : i64, tpu.core_type = #tpu.core_type<tc>, window_params = [{transform_indices = @transform_0, window_bounds = array<i64: 1, 8, 256>}, {pipeline_mode = #tpu.pipeline_mode<synchronous>, transform_indices = @transform_1, window_bounds = array<i64: 4, 8>}, {pipeline_mode = #tpu.pipeline_mode<synchronous>, transform_indices = @transform_2, window_bounds = array<i64: 4, 1>}, {pipeline_mode = #tpu.pipeline_mode<synchronous>, transform_indices = @transform_3, window_bounds = array<i64: 256, 49>}, {transform_indices = @transform_4, window_bounds = array<i64: 1, 4, 49>}]} {
    %c0 = arith.constant 0 : index
    %c0_0 = arith.constant 0 : index
    %0 = vector.load %arg2[%c0, %c0_0] : memref<4x8xf32, #tpu.memory_space<vmem>>, vector<4x8xf32>
    %c0_1 = arith.constant 0 : index
    %c0_2 = arith.constant 0 : index
    %1 = vector.load %arg4[%c0_1, %c0_2] : memref<256x49xf32, #tpu.memory_space<vmem>>, vector<256x49xf32>
    %c0_3 = arith.constant 0 : index
    %c0_4 = arith.constant 0 : index
    %2 = vector.load %arg3[%c0_3, %c0_4] : memref<4x1xf32, #tpu.memory_space<vmem>>, vector<4x1xf32>
    %c0_5 = arith.constant 0 : index
    %c0_6 = arith.constant 0 : index
    %c0_7 = arith.constant 0 : index
    %3 = vector.load %arg1[%c0_5, %c0_6, %c0_7] : memref<1x8x256xf32, #tpu.memory_space<vmem>>, vector<1x8x256xf32>
    %4 = vector.shape_cast %3 : vector<1x8x256xf32> to vector<8x256xf32>
    %cst = arith.constant dense<0.000000e+00> : vector<4x256xf32>
    %5 = tpu.matmul %0, %4, %cst {dimension_numbers = #tpu.dot_dimension_numbers<[1], [0], [0], [1], [0, 0, 1, 1], [], []>} : vector<4x8xf32>, vector<8x256xf32>, vector<4x256xf32> -> vector<4x256xf32>
    %cst_8 = arith.constant dense<0.000000e+00> : vector<4x49xf32>
    %6 = tpu.matmul %5, %1, %cst_8 {dimension_numbers = #tpu.dot_dimension_numbers<[1], [0], [0], [1], [0, 0, 1, 1], [], []>} : vector<4x256xf32>, vector<256x49xf32>, vector<4x49xf32> -> vector<4x49xf32>
    %7 = vector.broadcast %2 : vector<4x1xf32> to vector<4x49xf32>
    %8 = arith.addf %6, %7 : vector<4x49xf32>
    %c0_9 = arith.constant 0 : index
    %c0_10 = arith.constant 0 : index
    %c0_11 = arith.constant 0 : index
    %9 = vector.load %arg5[%c0_9, %c0_10, %c0_11] : memref<1x4x49xf32, #tpu.memory_space<vmem>>, vector<1x4x49xf32>
    %10 = vector.shape_cast %9 : vector<1x4x49xf32> to vector<4x49xf32>
    %11 = vector.shape_cast %8 : vector<4x49xf32> to vector<1x4x49xf32>
    tpu.vector_store %arg5[%c0_9, %c0_10, %c0_11], %11 {strides = array<i32>} : memref<1x4x49xf32, #tpu.memory_space<vmem>>, vector<1x4x49xf32>,
    return
  }
  func.func @transform_0(%arg0: i32) -> (i32, i32, i32) {
    %c0_i32 = arith.constant 0 : i32
    %c0_i32_0 = arith.constant 0 : i32
    %c0_i32_1 = arith.constant 0 : i32
    return %arg0, %c0_i32, %c0_i32_0 : i32, i32, i32
  }
  func.func @transform_1(%arg0: i32) -> (i32, i32) {
    %c0_i32 = arith.constant 0 : i32
    %c0_i32_0 = arith.constant 0 : i32
    %c0_i32_1 = arith.constant 0 : i32
    return %c0_i32, %c0_i32_0 : i32, i32
  }
  func.func @transform_2(%arg0: i32) -> (i32, i32) {
    %c0_i32 = arith.constant 0 : i32
    %c0_i32_0 = arith.constant 0 : i32
    %c0_i32_1 = arith.constant 0 : i32
    return %c0_i32, %c0_i32_0 : i32, i32
  }
  func.func @transform_3(%arg0: i32) -> (i32, i32) {
    %c0_i32 = arith.constant 0 : i32
    %c0_i32_0 = arith.constant 0 : i32
    %c0_i32_1 = arith.constant 0 : i32
    return %c0_i32, %c0_i32_0 : i32, i32
  }
  func.func @transform_4(%arg0: i32) -> (i32, i32, i32) {
    %c0_i32 = arith.constant 0 : i32
    %c0_i32_0 = arith.constant 0 : i32
    %c0_i32_1 = arith.constant 0 : i32
    return %arg0, %c0_i32, %c0_i32_0 : i32, i32, i32
  }
}

</mosaic_0001>

<llo_original>
// kernel: tpu_custom_call.1
$region0: #{tpu_custom_call.1}
  #allocation0 [shape = 'u32[]', space=smem, size = 0x4, offset = 0x4, fixed_abs, tag = 'smem constant byte address 0x4 - core index']
  #allocation1 [shape = 'u32[72,128]{1,0:T(1,128)}', space=vmem, size = 0x9000, scoped, tag = 'internal scratch']
  %s0 = inlined_call_operand.vmem [shape: f32[2,8,256], index: 0, kind: input, shape index: {}]
  %s1 = inlined_call_operand.vmem [shape: f32[4,8], index: 1, kind: input, shape index: {}]
  %s2 = inlined_call_operand.vmem [shape: f32[4,1], index: 2, kind: input, shape index: {}]
  %s3 = inlined_call_operand.vmem [shape: f32[256,49], index: 3, kind: input, shape index: {}]
  %s4 = inlined_call_operand.hbm [shape: f32[2,4,49], index: 4, kind: output, shape index: {}]
  %s5 = sld [smem:[#allocation0]]
  $region49: #{tpu_custom_call.1} parent=0
    _
  %s7 = ssub.s32 1, %s5
  %s8 = scalar_select 0, %s7, %s5
  $region1: #{tpu_custom_call.1} parent=0
    #allocation2 [shape = 'u8[4096]{0}', space=vmem, size = 0x1000, scoped, tag = 'output window, operand 0']
    #allocation3 [shape = 's32[2]{0}', space=sflag, size = 0x8, scoped, tag = 'scoped memory for tpu_custom_call.1']
    %9 = vsyncpa [#allocation3], 0
    %s10 = scalar_lea.sflag [#allocation3], 1
    %11 = vsyncpa %s10, 0
    loop: start=0, step=1, limit=4
    $region2: #{tpu_custom_call.1} parent=1 // loop_pre_header
      _
    $region3: #{tpu_custom_call.1} parent=1 // loop_header
      %s13 = sphi 0, %s17
      %p14 = scmp.ge.s32.totalorder %s13, 4
      %s23 = sphi 0, %s25
      %s26 = sphi 0, %s23
      %s27 = sphi 0, %s26
      %s43 = sphi 0, %s27
      %s47 = sphi 0, %s47
      %s49 = sphi 0, %s47
      %s50 = sphi 0, %s49
      %s64 = sphi 0, %s50
      %s68 = sphi 0, %s68
      %s70 = sphi 0, %s68
      %s71 = sphi 0, %s70
      %s85 = sphi 0, %s71
      %s89 = sphi 0, %s89
      %s91 = sphi 0, %s89
      %s92 = sphi 0, %s91
      %s106 = sphi 0, %s92
      %s112 = sphi 0, %s114
      %s115 = sphi 0, %s112
      %s116 = sphi 0, %s115
      %s132 = sphi 0, %s116
    $region4: #{tpu_custom_call.1} parent=1 // loop_header_branch
      %16 = sbr.rel (%p14) target = $region8
    $region5: #{tpu_custom_call.1} parent=1 // loop_body
      %s18 = ssub.s32 %s13, 1
      %s19 = ssub.s32 %s13, 2
      %s20 = sadd.s32 %s13, 1
      %s21 = ssub.s32 %s13, %s20
      %p22 = scmp.eq.s32.totalorder %s21, 0
      %s24 = sadd.s32 %s23, 1
      %s25 = scalar_select %p22, %s23, %s24
      %p28 = pneg %p22
      %p29 = scmp.eq.s32.totalorder %s13, 1
      %p30 = por %p28, %p29
      %p31 = scmp.ne.s32.totalorder %s23, %s26
      %p32 = scmp.eq.s32.totalorder %s13, 0
      %p33 = por %p31, %p32
      %p34 = scmp.ne.s32.totalorder %s23, %s26
      %p35 = scmp.eq.s32.totalorder %s18, 1
      %p36 = por %p34, %p35
      %p37 = scmp.ne.s32.totalorder %s26, %s27
      %p38 = scmp.eq.s32.totalorder %s18, 0
      %p39 = por %p37, %p38
      %p40 = scmp.ne.s32.totalorder %s26, %s27
      %p41 = scmp.eq.s32.totalorder %s19, 1
      %p42 = por %p40, %p41
      %p44 = scmp.ne.s32.totalorder %s27, %s43
      %p45 = scmp.eq.s32.totalorder %s19, 0
      %p46 = por %p44, %p45
      %s48 = sadd.s32 %s47, 1
      %p51 = scmp.eq.s32.totalorder %s13, 1
      %p52 = scmp.ne.s32.totalorder %s47, %s49
      %p53 = scmp.eq.s32.totalorder %s13, 0
      %p54 = por %p52, %p53
      %p55 = scmp.ne.s32.totalorder %s47, %s49
      %p56 = scmp.eq.s32.totalorder %s18, 1
      %p57 = por %p55, %p56
      %p58 = scmp.ne.s32.totalorder %s49, %s50
      %p59 = scmp.eq.s32.totalorder %s18, 0
      %p60 = por %p58, %p59
      %p61 = scmp.ne.s32.totalorder %s49, %s50
      %p62 = scmp.eq.s32.totalorder %s19, 1
      %p63 = por %p61, %p62
      %p65 = scmp.ne.s32.totalorder %s50, %s64
      %p66 = scmp.eq.s32.totalorder %s19, 0
      %p67 = por %p65, %p66
      %s69 = sadd.s32 %s68, 1
      %p72 = scmp.eq.s32.totalorder %s13, 1
      %p73 = scmp.ne.s32.totalorder %s68, %s70
      %p74 = scmp.eq.s32.totalorder %s13, 0
      %p75 = por %p73, %p74
      %p76 = scmp.ne.s32.totalorder %s68, %s70
      %p77 = scmp.eq.s32.totalorder %s18, 1
      %p78 = por %p76, %p77
      %p79 = scmp.ne.s32.totalorder %s70, %s71
      %p80 = scmp.eq.s32.totalorder %s18, 0
      %p81 = por %p79, %p80
      %p82 = scmp.ne.s32.totalorder %s70, %s71
      %p83 = scmp.eq.s32.totalorder %s19, 1
      %p84 = por %p82, %p83
      %p86 = scmp.ne.s32.totalorder %s71, %s85
      %p87 = scmp.eq.s32.totalorder %s19, 0
      %p88 = por %p86, %p87
      %s90 = sadd.s32 %s89, 1
      %p93 = scmp.eq.s32.totalorder %s13, 1
      %p94 = scmp.ne.s32.totalorder %s89, %s91
      %p95 = scmp.eq.s32.totalorder %s13, 0
      %p96 = por %p94, %p95
      %p97 = scmp.ne.s32.totalorder %s89, %s91
      %p98 = scmp.eq.s32.totalorder %s18, 1
      %p99 = por %p97, %p98
      %p100 = scmp.ne.s32.totalorder %s91, %s92
      %p101 = scmp.eq.s32.totalorder %s18, 0
      %p102 = por %p100, %p101
      %p103 = scmp.ne.s32.totalorder %s91, %s92
      %p104 = scmp.eq.s32.totalorder %s19, 1
      %p105 = por %p103, %p104
      %p107 = scmp.ne.s32.totalorder %s92, %s106
      %p108 = scmp.eq.s32.totalorder %s19, 0
      %p109 = por %p107, %p108
      %s110 = ssub.s32 %s13, %s20
      %p111 = scmp.eq.s32.totalorder %s110, 0
      %s113 = sadd.s32 %s112, 1
      %s114 = scalar_select %p111, %s112, %s113
      %p117 = pneg %p111
      %p118 = scmp.eq.s32.totalorder %s13, 1
      %p119 = por %p117, %p118
      %p120 = scmp.ne.s32.totalorder %s112, %s115
      %p121 = scmp.eq.s32.totalorder %s13, 0
      %p122 = por %p120, %p121
      %p123 = scmp.ne.s32.totalorder %s112, %s115
      %p124 = scmp.eq.s32.totalorder %s18, 1
      %p125 = por %p123, %p124
      %p126 = scmp.ne.s32.totalorder %s115, %s116
      %p127 = scmp.eq.s32.totalorder %s18, 0
      %p128 = por %p126, %p127
      %p129 = scmp.ne.s32.totalorder %s115, %s116
      %p130 = scmp.eq.s32.totalorder %s19, 1
      %p131 = por %p129, %p130
      %p133 = scmp.ne.s32.totalorder %s116, %s132
      %p134 = scmp.eq.s32.totalorder %s19, 0
      %p135 = por %p133, %p134
      %p136 = scmp.le.s32.totalorder 1, %s13
      %p137 = scmp.lt.s32.totalorder %s13, 3
      %p138 = pnand %p136, %p137
      %p139 = pneg %p138
      // Predicated region
      $region9: #{tpu_custom_call.1} parent=5 // pred_check
        _
      $region10: #{tpu_custom_call.1} parent=5 // pred_check_branch
        %141 = sbr.rel (%p138) target = $region12
      $region11: #{tpu_custom_call.1} parent=5 // pred_region
        %s142 = ssub.s32 %s13, 1
        // Predicated region
        $region13: #{tpu_custom_call.1} parent=11 // pred_check
          %p143 = pneg %p60
        $region14: #{tpu_custom_call.1} parent=11 // pred_check_branch
          %145 = sbr.rel (%p143) target = $region16
        $region15: #{tpu_custom_call.1} parent=11 // pred_region
          _
        $region16: #{tpu_custom_call.1} parent=11 // pred_fallthru
          _
        // Predicated region
        $region17: #{tpu_custom_call.1} parent=11 // pred_check
          %p146 = pneg %p81
        $region18: #{tpu_custom_call.1} parent=11 // pred_check_branch
          %148 = sbr.rel (%p146) target = $region20
        $region19: #{tpu_custom_call.1} parent=11 // pred_region
          _
        $region20: #{tpu_custom_call.1} parent=11 // pred_fallthru
          _
        // Predicated region
        $region21: #{tpu_custom_call.1} parent=11 // pred_check
          %p149 = pneg %p102
        $region22: #{tpu_custom_call.1} parent=11 // pred_check_branch
          %151 = sbr.rel (%p149) target = $region24
        $region23: #{tpu_custom_call.1} parent=11 // pred_region
          _
        $region24: #{tpu_custom_call.1} parent=11 // pred_fallthru
          _
      $region12: #{tpu_custom_call.1} parent=5 // pred_fallthru
        _
      %p152 = scmp.lt.s32.totalorder %s13, 2
      // Predicated region
      $region25: #{tpu_custom_call.1} parent=5 // pred_check
        %p153 = pneg %p152
      $region26: #{tpu_custom_call.1} parent=5 // pred_check_branch
        %155 = sbr.rel (%p153) target = $region28
      $region27: #{tpu_custom_call.1} parent=5 // pred_region
        // Predicated region
        $region29: #{tpu_custom_call.1} parent=27 // pred_check
          %p156 = pneg %p33
        $region30: #{tpu_custom_call.1} parent=27 // pred_check_branch
          %158 = sbr.rel (%p156) target = $region32
        $region31: #{tpu_custom_call.1} parent=27 // pred_region
          %p159 = scmp.lt.s32.totalorder %s13, 1
          %s160 = scalar_select %p159, %s13, 1
          %s161 = smul.addr %s160, 2
          %s162 = smul.addr %s161, 8
          %s163 = scalar_lea.vmem %s0, %s162
        $region32: #{tpu_custom_call.1} parent=27 // pred_fallthru
          _
      $region28: #{tpu_custom_call.1} parent=5 // pred_fallthru
        _
      %p164 = scmp.le.s32.totalorder 1, %s13
      %p165 = scmp.lt.s32.totalorder %s13, 3
      %p166 = pnand %p164, %p165
      %p167 = pneg %p166
      // Predicated region
      $region33: #{tpu_custom_call.1} parent=5 // pred_check
        _
      $region34: #{tpu_custom_call.1} parent=5 // pred_check_branch
        %169 = sbr.rel (%p166) target = $region36
      $region35: #{tpu_custom_call.1} parent=5 // pred_region
        %s170 = ssub.s32 %s13, 1
        %p171 = scmp.lt.s32.totalorder %s18, 1
        %s172 = scalar_select %p171, %s18, 1
        %s173 = smul.addr %s172, 2
        %s174 = smul.addr %s173, 8
        %s175 = scalar_lea.vmem %s0, %s174
        %p176 = pneg %p39
        %p177 = pneg %p36
        %p178 = pneg %p60
        %p179 = pneg %p57
        %p180 = pneg %p81
        %p181 = pneg %p78
        %p182 = pneg %p102
        %p183 = pneg %p99
        %p184 = pneg %p128
        %p185 = pneg %p125
        %s186 = sand.u32 %s115, 1
        %s187 = scalar_lea.sflag [#allocation3], %s186
        %s188 = sand.u32 %s115, 1
        %s189 = smul.addr %s188, 4
        %s190 = scalar_lea.vmem [#allocation2], %s189
        %p191 = scmp.lt.s32.totalorder %s18, 1
        %s192 = scalar_select %p191, %s18, 1
        %s193 = smul.addr %s192, 2
        %s194 = smul.addr %s193, 8
        %s195 = scalar_lea.vmem %s0, %s194
        %v196 = vld [vmem:[%s1] sm:$0xf]
        %v197 = vld [vmem:[%s3] sm:$0xff]
        %v198 = vld [vmem:[%s3 + $0x8] sm:$0xff]
        %v199 = vld [vmem:[%s3 + $0x10] sm:$0xff]
        %v200 = vld [vmem:[%s3 + $0x18] sm:$0xff]
        %v201 = vld [vmem:[%s3 + $0x20] sm:$0xff]
        %v202 = vld [vmem:[%s3 + $0x28] sm:$0xff]
        %v203 = vld [vmem:[%s3 + $0x30] sm:$0xff]
        %v204 = vld [vmem:[%s3 + $0x38] sm:$0xff]
        %v205 = vld [vmem:[%s3 + $0x40] sm:$0xff]
        %v206 = vld [vmem:[%s3 + $0x48] sm:$0xff]
        %v207 = vld [vmem:[%s3 + $0x50] sm:$0xff]
        %v208 = vld [vmem:[%s3 + $0x58] sm:$0xff]
        %v209 = vld [vmem:[%s3 + $0x60] sm:$0xff]
        %v210 = vld [vmem:[%s3 + $0x68] sm:$0xff]
        %v211 = vld [vmem:[%s3 + $0x70] sm:$0xff]
        %v212 = vld [vmem:[%s3 + $0x78] sm:$0xff]
        %v213 = vld [vmem:[%s3 + $0x80] sm:$0xff]
        %v214 = vld [vmem:[%s3 + $0x88] sm:$0xff]
        %v215 = vld [vmem:[%s3 + $0x90] sm:$0xff]
        %v216 = vld [vmem:[%s3 + $0x98] sm:$0xff]
        %v217 = vld [vmem:[%s3 + $0xa0] sm:$0xff]
        %v218 = vld [vmem:[%s3 + $0xa8] sm:$0xff]
        %v219 = vld [vmem:[%s3 + $0xb0] sm:$0xff]
        %v220 = vld [vmem:[%s3 + $0xb8] sm:$0xff]
        %v221 = vld [vmem:[%s3 + $0xc0] sm:$0xff]
        %v222 = vld [vmem:[%s3 + $0xc8] sm:$0xff]
        %v223 = vld [vmem:[%s3 + $0xd0] sm:$0xff]
        %v224 = vld [vmem:[%s3 + $0xd8] sm:$0xff]
        %v225 = vld [vmem:[%s3 + $0xe0] sm:$0xff]
        %v226 = vld [vmem:[%s3 + $0xe8] sm:$0xff]
        %v227 = vld [vmem:[%s3 + $0xf0] sm:$0xff]
        %v228 = vld [vmem:[%s3 + $0xf8] sm:$0xff]
        %v229 = vld [vmem:[%s2] sm:$0xf]
        %v230 = vld [vmem:[%s195] sm:$0xff]
        %v231 = vld [vmem:[%s195 + $0x8] sm:$0xff]
        %vm232 = vcmask 64512
        %v234 = vsel %vm232, %v196, 0
        %236 = vmatpush.msra.mxu0 0.0
        %237 = vmatpush.msra.mxu0 0.0
        %238 = vmatpush.msra.mxu0 0.0
        %239 = vmatpush.msra.mxu0 0.0
        %240 = vmatpush.msra.mxu0 0.0
        %241 = vmatpush.msra.mxu0 0.0
        %242 = vmatpush.msra.mxu0 0.0
        %243 = vmatpush.msra.mxu0 0.0
        %244 = vmatpush.msra.mxu0 0.0
        %245 = vmatpush.msra.mxu0 0.0
        %246 = vmatpush.msra.mxu0 0.0
        %247 = vmatpush.msra.mxu0 0.0
        %248 = vmatpush.msra.mxu0 0.0
        %249 = vmatpush.msra.mxu0 0.0
        %250 = vmatpush.msra.mxu0 0.0
        %251 = vmatpush.msra.mxu0 %v230
        %252 = vmatmul.f32.gmra.mxu0 %v234
        %v253 = vpop.f32.mrf.mxu0
        %v254 = vadd.f32 0.0, %v253
        %255 = vdwg.mxu0
        %256 = vmatpush.msra.mxu0 0.0
        %257 = vmatpush.msra.mxu0 0.0
        %258 = vmatpush.msra.mxu0 0.0
        %259 = vmatpush.msra.mxu0 0.0
        %260 = vmatpush.msra.mxu0 0.0
        %261 = vmatpush.msra.mxu0 0.0
        %262 = vmatpush.msra.mxu0 0.0
        %263 = vmatpush.msra.mxu0 0.0
        %264 = vmatpush.msra.mxu0 0.0
        %265 = vmatpush.msra.mxu0 0.0
        %266 = vmatpush.msra.mxu0 0.0
        %267 = vmatpush.msra.mxu0 0.0
        %268 = vmatpush.msra.mxu0 0.0
        %269 = vmatpush.msra.mxu0 0.0
        %270 = vmatpush.msra.mxu0 0.0
        %271 = vmatpush.msra.mxu0 %v231
        %272 = vmatmul.f32.gmra.mxu0 %v234
        %v273 = vpop.f32.mrf.mxu0
        %v274 = vadd.f32 0.0, %v273
        %275 = vdwg.mxu0
        %277 = vset.pattern.permute.xlu0 0
        %278 = vperm.xlu0 %277, %v229
        %v279 = vpop.permute.xlu0 %278
        %281 = vmatpush.msra.mxu0 %v212
        %282 = vmatpush.msra.mxu0 %v211
        %283 = vmatpush.msra.mxu0 %v210
        %284 = vmatpush.msra.mxu0 %v209
        %285 = vmatpush.msra.mxu0 %v208
        %286 = vmatpush.msra.mxu0 %v207
        %287 = vmatpush.msra.mxu0 %v206
        %288 = vmatpush.msra.mxu0 %v205
        %289 = vmatpush.msra.mxu0 %v204
        %290 = vmatpush.msra.mxu0 %v203
        %291 = vmatpush.msra.mxu0 %v202
        %292 = vmatpush.msra.mxu0 %v201
        %293 = vmatpush.msra.mxu0 %v200
        %294 = vmatpush.msra.mxu0 %v199
        %295 = vmatpush.msra.mxu0 %v198
        %296 = vmatpush.msra.mxu0 %v197
        %297 = vmatmul.f32.gmra.mxu0 %v254
        %v298 = vpop.f32.mrf.mxu0
        %v299 = vadd.f32 %v279, %v298
        %300 = vdwg.mxu0
        %301 = vmatpush.msra.mxu0 %v228
        %302 = vmatpush.msra.mxu0 %v227
        %303 = vmatpush.msra.mxu0 %v226
        %304 = vmatpush.msra.mxu0 %v225
        %305 = vmatpush.msra.mxu0 %v224
        %306 = vmatpush.msra.mxu0 %v223
        %307 = vmatpush.msra.mxu0 %v222
        %308 = vmatpush.msra.mxu0 %v221
        %309 = vmatpush.msra.mxu0 %v220
        %310 = vmatpush.msra.mxu0 %v219
        %311 = vmatpush.msra.mxu0 %v218
        %312 = vmatpush.msra.mxu0 %v217
        %313 = vmatpush.msra.mxu0 %v216
        %314 = vmatpush.msra.mxu0 %v215
        %315 = vmatpush.msra.mxu0 %v214
        %316 = vmatpush.msra.mxu0 %v213
        %317 = vmatmul.f32.gmra.mxu0 %v274
        %v318 = vpop.f32.mrf.mxu0
        %v319 = vadd.f32 %v299, %v318
        %320 = vdwg.mxu0
        %vm321 = vcmask 396288
        %322 = vst.msk [vmem:[%s190] sm:$0xf] %vm321, %v319
        %s323 = sand.u32 %s115, 1
        %s324 = scalar_lea.sflag [#allocation3], %s323
        %s325 = sand.u32 %s115, 1
        %s326 = smul.addr %s325, 4
        %s327 = scalar_lea.vmem [#allocation2], %s326
        // Predicated region
        $region37: #{tpu_custom_call.1} parent=35 // pred_check
          %p328 = pneg %p125
        $region38: #{tpu_custom_call.1} parent=35 // pred_check_branch
          %330 = sbr.rel (%p328) target = $region40
        $region39: #{tpu_custom_call.1} parent=35 // pred_region
          %332 = vsyncadd %s324, 0
          %s333 = smul.addr %s18, 4
          %s334 = scalar_lea.hbm %s4, %s333
          %s336 = sshll.u32 %s327, 4
          %s337 = int_to_ptr.vmem [resolvable:$true] %s336
          %s338 = sshll.u32 %s334, 4
          %s339 = int_to_ptr.hbm [resolvable:$true] %s338
          %341 = dma.vmem_to_hbm [thread:$0]  %s337, 64, %s339, %s324
        $region40: #{tpu_custom_call.1} parent=35 // pred_fallthru
          _
      $region36: #{tpu_custom_call.1} parent=5 // pred_fallthru
        _
      %p342 = scmp.le.s32.totalorder 2, %s13
      // Predicated region
      $region41: #{tpu_custom_call.1} parent=5 // pred_check
        %p343 = pneg %p342
      $region42: #{tpu_custom_call.1} parent=5 // pred_check_branch
        %345 = sbr.rel (%p343) target = $region44
      $region43: #{tpu_custom_call.1} parent=5 // pred_region
        %s346 = ssub.s32 %s13, 2
        // Predicated region
        $region45: #{tpu_custom_call.1} parent=43 // pred_check
          %p347 = pneg %p131
        $region46: #{tpu_custom_call.1} parent=43 // pred_check_branch
          %349 = sbr.rel (%p347) target = $region48
        $region47: #{tpu_custom_call.1} parent=43 // pred_region
          %s350 = sand.u32 %s116, 1
          %s351 = scalar_lea.sflag [#allocation3], %s350
          %s352 = sand.u32 %s116, 1
          %s353 = smul.addr %s352, 4
          %s354 = scalar_lea.vmem [#allocation2], %s353
          %356 = dma.done %s351, 64
        $region48: #{tpu_custom_call.1} parent=43 // pred_fallthru
          _
      $region44: #{tpu_custom_call.1} parent=5 // pred_fallthru
        _
    $region6: #{tpu_custom_call.1} parent=1 // loop_footer
      %s17 = sadd.s32 1, %s13
    $region7: #{tpu_custom_call.1} parent=1 // loop_footer_branch
      %12 = sbr.rel target = $region3
    $region8: #{tpu_custom_call.1} parent=1 // loop_exit
      _
    %357 = vsyncpa [#allocation3], 1
    %s358 = scalar_lea.sflag [#allocation3], 1
    %359 = vsyncpa %s358, 1

</llo_original>
